<compile_context>
chip_gen: v5e
topology: v5e:2x2
jax: 0.10.0
libtpu: 0.0.40
codegen_flags: <defaults>
</compile_context>

<pallas_src>
import jax
import jax.numpy as jnp
from jax.experimental import pallas as pl
from jax.experimental.pallas import tpu as pltpu

_LANE = 128
_SUBLANE = 8


def _round_up(x, m):
    return (x + m - 1) // m * m


def gcn_conv_kernel(x_ref, adj_ref, w_ref, out_ref):
    # x_ref:   (Bb, Np, F_in)   block of graphs' node features
    # adj_ref: (Bb, Np, Np)     block of adjacencies
    # w_ref:   (F_in, Fp)       shared weight, F_out zero-padded to lane multiple
    # out_ref: (Bb, Np, Fp)
    Bb, Np, F_in = x_ref.shape
    Fp = w_ref.shape[1]

    # Stage 1: feature transform. Flatten batch*nodes into the MXU M dimension
    # (Np is a multiple of 8, so the reshape is tile-aligned / free).
    x2d = x_ref[...].reshape(Bb * Np, F_in)
    support = jnp.dot(x2d, w_ref[...], preferred_element_type=jnp.float32)
    support = support.reshape(Bb, Np, Fp).astype(adj_ref.dtype)

    # Stage 2: neighborhood aggregation, batched matmul per graph.
    out = jnp.einsum(
        "bnm,bmo->bno", adj_ref[...], support, preferred_element_type=jnp.float32
    )
    out_ref[...] = out.astype(out_ref.dtype)


def gcn_conv(
    x,
    adj,
    weight,
    *,
    block_b=8,
    compute_dtype=None,
    vmem_limit_bytes=32 * 1024 * 1024,
):
    """x: [B, N, F_in], adj: [B, N, N], weight: [F_in, F_out] -> [B, N, F_out]."""
    B, N, F_in = x.shape
    F_out = weight.shape[1]
    assert adj.shape == (B, N, N)
    assert weight.shape[0] == F_in

    out_dtype = x.dtype
    if compute_dtype is not None:
        # Feed the MXU narrow inputs (e.g. bf16); accumulation stays f32.
        x = x.astype(compute_dtype)
        adj = adj.astype(compute_dtype)
        weight = weight.astype(compute_dtype)

    # Lane-dense output: pad the feature dim to a multiple of 128 (zero columns).
    Fp = _round_up(F_out, _LANE)
    if Fp != F_out:
        weight = jnp.pad(weight, ((0, 0), (0, Fp - F_out)))

    # Pad N to a sublane multiple so the in-kernel flatten is tile-aligned.
    Np = _round_up(N, _SUBLANE)
    if Np != N:
        x = jnp.pad(x, ((0, 0), (0, Np - N), (0, 0)))
        adj = jnp.pad(adj, ((0, 0), (0, Np - N), (0, Np - N)))

    # Multiple graphs per grid step; pad batch so the grid never runs OOB.
    Bb = max(1, min(block_b, B))
    Bp = _round_up(B, Bb)
    if Bp != B:
        x = jnp.pad(x, ((0, Bp - B), (0, 0), (0, 0)))
        adj = jnp.pad(adj, ((0, Bp - B), (0, 0), (0, 0)))
    grid = (Bp // Bb,)

    in_elt = jnp.dtype(x.dtype).itemsize
    out_elt = jnp.dtype(out_dtype).itemsize
    cost = pl.CostEstimate(
        flops=2 * Bp * Np * (F_in * Fp + Np * Fp),
        transcendentals=0,
        bytes_accessed=in_elt * (Bp * Np * F_in + Bp * Np * Np + F_in * Fp)
        + out_elt * Bp * Np * Fp,
    )

    out_padded = pl.pallas_call(
        gcn_conv_kernel,
        out_shape=jax.ShapeDtypeStruct((Bp, Np, Fp), out_dtype),
        grid_spec=pltpu.PrefetchScalarGridSpec(
            num_scalar_prefetch=0,
            grid=grid,
            in_specs=[
                pl.BlockSpec((Bb, Np, F_in), lambda b: (b, 0, 0)),
                pl.BlockSpec((Bb, Np, Np), lambda b: (b, 0, 0)),
                pl.BlockSpec((F_in, Fp), lambda b: (0, 0)),  # weight stays resident
            ],
            out_specs=pl.BlockSpec((Bb, Np, Fp), lambda b: (b, 0, 0)),
        ),
        compiler_params=pltpu.CompilerParams(
            dimension_semantics=("parallel",),  # batch axis: both TCs on v7x
            vmem_limit_bytes=vmem_limit_bytes,
        ),
        cost_estimate=cost,
    )(x, adj, weight)

    # Strip batch / node / feature padding.
    return out_padded[:B, :N, :F_out]


def xavier_uniform(key, in_features, out_features, dtype=jnp.float32):
    # Matches nn.init.xavier_uniform_ for a (in_features, out_features) matrix.
    bound = (6.0 / (in_features + out_features)) ** 0.5
    return jax.random.uniform(
        key, (in_features, out_features), dtype=dtype, minval=-bound, maxval=bound
    )


if __name__ == "__main__":
    B, N = 8, 16            # batch of graphs, nodes per graph
    F_in, F_out = 32, 32    # feature dims

    key = jax.random.PRNGKey(0)
    k_x, k_adj, k_w = jax.random.split(key, 3)

    x = jax.random.normal(k_x, (B, N, F_in), dtype=jnp.float32)
    # Symmetric-ish dense "adjacency" (values irrelevant to semantics)
    adj_raw = jax.random.uniform(k_adj, (B, N, N), dtype=jnp.float32)
    adj = 0.5 * (adj_raw + jnp.swapaxes(adj_raw, -1, -2))
    weight = xavier_uniform(k_w, F_in, F_out)

    # Reference (same semantics as the torch module)
    ref = jnp.einsum("bnm,bmf->bnf", adj, x @ weight)

    # f32 path — strict semantics check (block_b=4 -> grid of 2 parallel steps).
    out = gcn_conv(x, adj, weight, block_b=4)
    out = jax.block_until_ready(out)
    assert out.shape == (B, N, F_out)
    assert jnp.allclose(out, ref, atol=1e-4, rtol=1e-4)

    # bf16-fed MXU path (f32 accumulation) — loose numerical check.
    out_bf16 = gcn_conv(x, adj, weight, block_b=4, compute_dtype=jnp.bfloat16)
    out_bf16 = jax.block_until_ready(out_bf16)
    assert out_bf16.shape == (B, N, F_out)
    assert jnp.allclose(out_bf16, ref, atol=0.5, rtol=0.1)

    print("KERNEL_OK")
</pallas_src>

<mosaic_0001>
module attributes {stable_mosaic.version = 11 : i64} {
  func.func @gcn_conv_kernel(%arg0: i32, %arg1: memref<4x16x32xf32, #tpu.memory_space<vmem>>, %arg2: memref<4x16x16xf32, #tpu.memory_space<vmem>>, %arg3: memref<32x128xf32, #tpu.memory_space<vmem>>, %arg4: memref<4x16x128xf32, #tpu.memory_space<vmem>>) attributes {dimension_semantics = [#tpu.dimension_semantics<parallel>], iteration_bounds = array<i64: 2>, scalar_prefetch = 0 : i64, scratch_operands = 0 : i64, tpu.core_type = #tpu.core_type<tc>, window_params = [{transform_indices = @transform_0, window_bounds = array<i64: 4, 16, 32>}, {transform_indices = @transform_1, window_bounds = array<i64: 4, 16, 16>}, {pipeline_mode = #tpu.pipeline_mode<synchronous>, transform_indices = @transform_2, window_bounds = array<i64: 32, 128>}, {transform_indices = @transform_3, window_bounds = array<i64: 4, 16, 128>}]} {
    %c0 = arith.constant 0 : index
    %c0_0 = arith.constant 0 : index
    %c0_1 = arith.constant 0 : index
    %0 = vector.load %arg1[%c0, %c0_0, %c0_1] : memref<4x16x32xf32, #tpu.memory_space<vmem>>, vector<4x16x32xf32>
    %1 = vector.shape_cast %0 : vector<4x16x32xf32> to vector<64x32xf32>
    %c0_2 = arith.constant 0 : index
    %c0_3 = arith.constant 0 : index
    %2 = vector.load %arg3[%c0_2, %c0_3] : memref<32x128xf32, #tpu.memory_space<vmem>>, vector<32x128xf32>
    %cst = arith.constant dense<0.000000e+00> : vector<64x128xf32>
    %3 = tpu.matmul %1, %2, %cst {dimension_numbers = #tpu.dot_dimension_numbers<[1], [0], [0], [1], [0, 0, 1, 1], [], []>} : vector<64x32xf32>, vector<32x128xf32>, vector<64x128xf32> -> vector<64x128xf32>
    %4 = vector.shape_cast %3 : vector<64x128xf32> to vector<4x16x128xf32>
    %c0_4 = arith.constant 0 : index
    %c0_5 = arith.constant 0 : index
    %c0_6 = arith.constant 0 : index
    %5 = vector.load %arg2[%c0_4, %c0_5, %c0_6] : memref<4x16x16xf32, #tpu.memory_space<vmem>>, vector<4x16x16xf32>
    "tpu.trace_start"() <{level = 10 : i32, message = "bnm,bmo->bno"}> : () -> ()
    %cst_7 = arith.constant dense<0.000000e+00> : vector<4x16x128xf32>
    %6 = tpu.matmul %5, %4, %cst_7 {dimension_numbers = #tpu.dot_dimension_numbers<[2], [1], [1], [2], [0, 0, 0, 1, 1, 2], [0], [0]>} : vector<4x16x16xf32>, vector<4x16x128xf32>, vector<4x16x128xf32> -> vector<4x16x128xf32>
    "tpu.trace_stop"() : () -> ()
    %c0_8 = arith.constant 0 : index
    %c0_9 = arith.constant 0 : index
    %c0_10 = arith.constant 0 : index
    %7 = vector.load %arg4[%c0_8, %c0_9, %c0_10] : memref<4x16x128xf32, #tpu.memory_space<vmem>>, vector<4x16x128xf32>
    tpu.vector_store %arg4[%c0_8, %c0_9, %c0_10], %6 {strides = array<i32>} : memref<4x16x128xf32, #tpu.memory_space<vmem>>, vector<4x16x128xf32>,
    return
  }
  func.func @transform_0(%arg0: i32) -> (i32, i32, i32) {
    %c0_i32 = arith.constant 0 : i32
    %c0_i32_0 = arith.constant 0 : i32
    %c0_i32_1 = arith.constant 0 : i32
    return %arg0, %c0_i32, %c0_i32_0 : i32, i32, i32
  }
  func.func @transform_1(%arg0: i32) -> (i32, i32, i32) {
    %c0_i32 = arith.constant 0 : i32
    %c0_i32_0 = arith.constant 0 : i32
    %c0_i32_1 = arith.constant 0 : i32
    return %arg0, %c0_i32, %c0_i32_0 : i32, i32, i32
  }
  func.func @transform_2(%arg0: i32) -> (i32, i32) {
    %c0_i32 = arith.constant 0 : i32
    %c0_i32_0 = arith.constant 0 : i32
    %c0_i32_1 = arith.constant 0 : i32
    return %c0_i32, %c0_i32_0 : i32, i32
  }
  func.func @transform_3(%arg0: i32) -> (i32, i32, i32) {
    %c0_i32 = arith.constant 0 : i32
    %c0_i32_0 = arith.constant 0 : i32
    %c0_i32_1 = arith.constant 0 : i32
    return %arg0, %c0_i32, %c0_i32_0 : i32, i32, i32
  }
}

</mosaic_0001>

<llo_original>
// kernel: tpu_custom_call.1
$region0: #{tpu_custom_call.1}
  #allocation0 [shape = 'u32[]', space=smem, size = 0x4, offset = 0x4, fixed_abs, tag = 'smem constant byte address 0x4 - core index']
  #allocation1 [shape = 'u32[72,128]{1,0:T(1,128)}', space=vmem, size = 0x9000, scoped, tag = 'internal scratch']
  %s0 = inlined_call_operand.hbm [shape: f32[8,16,32], index: 0, kind: input, shape index: {}]
  %s1 = inlined_call_operand.hbm [shape: f32[8,16,16], index: 1, kind: input, shape index: {}]
  %s2 = inlined_call_operand.hbm [shape: f32[32,128], index: 2, kind: input, shape index: {}]
  %s3 = inlined_call_operand.hbm [shape: f32[8,16,128], index: 3, kind: output, shape index: {}]
  %s4 = sld [smem:[#allocation0]]
  $region57: #{tpu_custom_call.1} parent=0
    _
  %s6 = ssub.s32 1, %s4
  %s7 = scalar_select 0, %s6, %s4
  $region1: #{tpu_custom_call.1} parent=0
    #allocation2 [shape = 'u8[65536]{0}', space=vmem, size = 0x10000, scoped, tag = 'input window, operand 0']
    #allocation3 [shape = 's32[2]{0}', space=sflag, size = 0x8, scoped, tag = 'scoped memory for tpu_custom_call.1']
    #allocation4 [shape = 's32[2]{0}', space=sflag, size = 0x8, scoped, tag = 'scoped memory for tpu_custom_call.1']
    #allocation5 [shape = 'u8[65536]{0}', space=vmem, size = 0x10000, scoped, tag = 'input window, operand 1']
    #allocation6 [shape = 's32[2]{0}', space=sflag, size = 0x8, scoped, tag = 'scoped memory for tpu_custom_call.1']
    #allocation7 [shape = 'u8[16384]{0}', space=vmem, size = 0x4000, scoped, tag = 'input window, operand 2, single buffered']
    #allocation8 [shape = 'u8[65536]{0}', space=vmem, size = 0x10000, scoped, tag = 'output window, operand 0']
    %8 = vsyncpa [#allocation3], 0
    %s9 = scalar_lea.sflag [#allocation3], 1
    %10 = vsyncpa %s9, 0
    %11 = vsyncpa [#allocation6], 0
    %s12 = scalar_lea.sflag [#allocation6], 1
    %13 = vsyncpa %s12, 0
    %14 = vsyncpa [#allocation4], 0
    %s15 = scalar_lea.sflag [#allocation4], 1
    %16 = vsyncpa %s15, 0
    loop: start=0, step=1, limit=4
    $region2: #{tpu_custom_call.1} parent=1 // loop_pre_header
      _
    $region3: #{tpu_custom_call.1} parent=1 // loop_header
      %s18 = sphi 0, %s22
      %p19 = scmp.ge.s32.totalorder %s18, 4
      %s28 = sphi 0, %s30
      %s31 = sphi 0, %s28
      %s32 = sphi 0, %s31
      %s48 = sphi 0, %s32
      %s54 = sphi 0, %s56
      %s57 = sphi 0, %s54
      %s58 = sphi 0, %s57
      %s74 = sphi 0, %s58
      %s78 = sphi 0, %s78
      %s80 = sphi 0, %s78
      %s81 = sphi 0, %s80
      %s95 = sphi 0, %s81
      %s101 = sphi 0, %s103
      %s104 = sphi 0, %s101
      %s105 = sphi 0, %s104
      %s121 = sphi 0, %s105
    $region4: #{tpu_custom_call.1} parent=1 // loop_header_branch
      %21 = sbr.rel (%p19) target = $region8
    $region5: #{tpu_custom_call.1} parent=1 // loop_body
      %s23 = ssub.s32 %s18, 1
      %s24 = ssub.s32 %s18, 2
      %s25 = sadd.s32 %s18, 1
      %s26 = ssub.s32 %s18, %s25
      %p27 = scmp.eq.s32.totalorder %s26, 0
      %s29 = sadd.s32 %s28, 1
      %s30 = scalar_select %p27, %s28, %s29
      %p33 = pneg %p27
      %p34 = scmp.eq.s32.totalorder %s18, 1
      %p35 = por %p33, %p34
      %p36 = scmp.ne.s32.totalorder %s28, %s31
      %p37 = scmp.eq.s32.totalorder %s18, 0
      %p38 = por %p36, %p37
      %p39 = scmp.ne.s32.totalorder %s28, %s31
      %p40 = scmp.eq.s32.totalorder %s23, 1
      %p41 = por %p39, %p40
      %p42 = scmp.ne.s32.totalorder %s31, %s32
      %p43 = scmp.eq.s32.totalorder %s23, 0
      %p44 = por %p42, %p43
      %p45 = scmp.ne.s32.totalorder %s31, %s32
      %p46 = scmp.eq.s32.totalorder %s24, 1
      %p47 = por %p45, %p46
      %p49 = scmp.ne.s32.totalorder %s32, %s48
      %p50 = scmp.eq.s32.totalorder %s24, 0
      %p51 = por %p49, %p50
      %s52 = ssub.s32 %s18, %s25
      %p53 = scmp.eq.s32.totalorder %s52, 0
      %s55 = sadd.s32 %s54, 1
      %s56 = scalar_select %p53, %s54, %s55
      %p59 = pneg %p53
      %p60 = scmp.eq.s32.totalorder %s18, 1
      %p61 = por %p59, %p60
      %p62 = scmp.ne.s32.totalorder %s54, %s57
      %p63 = scmp.eq.s32.totalorder %s18, 0
      %p64 = por %p62, %p63
      %p65 = scmp.ne.s32.totalorder %s54, %s57
      %p66 = scmp.eq.s32.totalorder %s23, 1
      %p67 = por %p65, %p66
      %p68 = scmp.ne.s32.totalorder %s57, %s58
      %p69 = scmp.eq.s32.totalorder %s23, 0
      %p70 = por %p68, %p69
      %p71 = scmp.ne.s32.totalorder %s57, %s58
      %p72 = scmp.eq.s32.totalorder %s24, 1
      %p73 = por %p71, %p72
      %p75 = scmp.ne.s32.totalorder %s58, %s74
      %p76 = scmp.eq.s32.totalorder %s24, 0
      %p77 = por %p75, %p76
      %s79 = sadd.s32 %s78, 1
      %p82 = scmp.eq.s32.totalorder %s18, 1
      %p83 = scmp.ne.s32.totalorder %s78, %s80
      %p84 = scmp.eq.s32.totalorder %s18, 0
      %p85 = por %p83, %p84
      %p86 = scmp.ne.s32.totalorder %s78, %s80
      %p87 = scmp.eq.s32.totalorder %s23, 1
      %p88 = por %p86, %p87
      %p89 = scmp.ne.s32.totalorder %s80, %s81
      %p90 = scmp.eq.s32.totalorder %s23, 0
      %p91 = por %p89, %p90
      %p92 = scmp.ne.s32.totalorder %s80, %s81
      %p93 = scmp.eq.s32.totalorder %s24, 1
      %p94 = por %p92, %p93
      %p96 = scmp.ne.s32.totalorder %s81, %s95
      %p97 = scmp.eq.s32.totalorder %s24, 0
      %p98 = por %p96, %p97
      %s99 = ssub.s32 %s18, %s25
      %p100 = scmp.eq.s32.totalorder %s99, 0
      %s102 = sadd.s32 %s101, 1
      %s103 = scalar_select %p100, %s101, %s102
      %p106 = pneg %p100
      %p107 = scmp.eq.s32.totalorder %s18, 1
      %p108 = por %p106, %p107
      %p109 = scmp.ne.s32.totalorder %s101, %s104
      %p110 = scmp.eq.s32.totalorder %s18, 0
      %p111 = por %p109, %p110
      %p112 = scmp.ne.s32.totalorder %s101, %s104
      %p113 = scmp.eq.s32.totalorder %s23, 1
      %p114 = por %p112, %p113
      %p115 = scmp.ne.s32.totalorder %s104, %s105
      %p116 = scmp.eq.s32.totalorder %s23, 0
      %p117 = por %p115, %p116
      %p118 = scmp.ne.s32.totalorder %s104, %s105
      %p119 = scmp.eq.s32.totalorder %s24, 1
      %p120 = por %p118, %p119
      %p122 = scmp.ne.s32.totalorder %s105, %s121
      %p123 = scmp.eq.s32.totalorder %s24, 0
      %p124 = por %p122, %p123
      %p125 = scmp.le.s32.totalorder 1, %s18
      %p126 = scmp.lt.s32.totalorder %s18, 3
      %p127 = pnand %p125, %p126
      %p128 = pneg %p127
      // Predicated region
      $region9: #{tpu_custom_call.1} parent=5 // pred_check
        _
      $region10: #{tpu_custom_call.1} parent=5 // pred_check_branch
        %130 = sbr.rel (%p127) target = $region12
      $region11: #{tpu_custom_call.1} parent=5 // pred_region
        %s131 = ssub.s32 %s18, 1
        // Predicated region
        $region13: #{tpu_custom_call.1} parent=11 // pred_check
          %p132 = pneg %p91
        $region14: #{tpu_custom_call.1} parent=11 // pred_check_branch
          %134 = sbr.rel (%p132) target = $region16
        $region15: #{tpu_custom_call.1} parent=11 // pred_region
          %136 = vsyncadd [#allocation6], 0
          %s137 = sshll.u32 %s2, 4
          %s138 = int_to_ptr.hbm [resolvable:$true] %s137
          %s139 = sshll.u32 [#allocation7], 4
          %s140 = int_to_ptr.vmem [resolvable:$true] %s139
          %145 = dma.hbm_to_vmem [thread:$0]  %s138, 512, %s140, [#allocation6], 128, 128, 8
        $region16: #{tpu_custom_call.1} parent=11 // pred_fallthru
          _
      $region12: #{tpu_custom_call.1} parent=5 // pred_fallthru
        _
      %p146 = scmp.lt.s32.totalorder %s18, 2
      // Predicated region
      $region17: #{tpu_custom_call.1} parent=5 // pred_check
        %p147 = pneg %p146
      $region18: #{tpu_custom_call.1} parent=5 // pred_check_branch
        %149 = sbr.rel (%p147) target = $region20
      $region19: #{tpu_custom_call.1} parent=5 // pred_region
        // Predicated region
        $region21: #{tpu_custom_call.1} parent=19 // pred_check
          %p150 = pneg %p38
        $region22: #{tpu_custom_call.1} parent=19 // pred_check_branch
          %152 = sbr.rel (%p150) target = $region24
        $region23: #{tpu_custom_call.1} parent=19 // pred_region
          %s153 = sand.u32 %s28, 1
          %s154 = scalar_lea.sflag [#allocation3], %s153
          %s155 = sand.u32 %s28, 1
          %s156 = smul.addr %s155, 64
          %s157 = scalar_lea.vmem [#allocation2], %s156
          %s158 = smul.u32 4, %s18
          %160 = vsyncadd %s154, 0
          %s161 = smul.addr %s158, 2
          %s162 = smul.addr %s161, 8
          %s163 = scalar_lea.hbm %s0, %s162
          %s164 = sshll.u32 %s163, 4
          %s165 = int_to_ptr.hbm [resolvable:$true] %s164
          %s166 = sshll.u32 %s157, 4
          %s167 = int_to_ptr.vmem [resolvable:$true] %s166
          %172 = dma.hbm_to_vmem [thread:$0]  %s165, 1024, %s167, %s154, 128, 128, 8
        $region24: #{tpu_custom_call.1} parent=19 // pred_fallthru
          _
        // Predicated region
        $region25: #{tpu_custom_call.1} parent=19 // pred_check
          %p173 = pneg %p64
        $region26: #{tpu_custom_call.1} parent=19 // pred_check_branch
          %175 = sbr.rel (%p173) target = $region28
        $region27: #{tpu_custom_call.1} parent=19 // pred_region
          %s176 = sand.u32 %s18, 1
          %s177 = scalar_lea.sflag [#allocation6], %s176
          %s178 = sand.u32 %s54, 1
          %s179 = smul.addr %s178, 64
          %s180 = scalar_lea.vmem [#allocation5], %s179
          %s181 = smul.u32 4, %s18
          %183 = vsyncadd %s177, 0
          %s184 = smul.addr %s181, 2
          %s185 = smul.addr %s184, 8
          %s186 = scalar_lea.hbm %s1, %s185
          %s187 = sshll.u32 %s186, 4
          %s188 = int_to_ptr.hbm [resolvable:$true] %s187
          %s189 = sshll.u32 %s180, 4
          %s190 = int_to_ptr.vmem [resolvable:$true] %s189
          %195 = dma.hbm_to_vmem [thread:$0]  %s188, 1024, %s190, %s177, 128, 128, 8
        $region28: #{tpu_custom_call.1} parent=19 // pred_fallthru
          _
      $region20: #{tpu_custom_call.1} parent=5 // pred_fallthru
        _
      %p196 = scmp.le.s32.totalorder 1, %s18
      %p197 = scmp.lt.s32.totalorder %s18, 3
      %p198 = pnand %p196, %p197
      %p199 = pneg %p198
      // Predicated region
      $region29: #{tpu_custom_call.1} parent=5 // pred_check
        _
      $region30: #{tpu_custom_call.1} parent=5 // pred_check_branch
        %201 = sbr.rel (%p198) target = $region32
      $region31: #{tpu_custom_call.1} parent=5 // pred_region
        %s202 = ssub.s32 %s18, 1
        %s203 = sand.u32 %s31, 1
        %s204 = scalar_lea.sflag [#allocation3], %s203
        %s205 = sand.u32 %s31, 1
        %s206 = smul.addr %s205, 64
        %s207 = scalar_lea.vmem [#allocation2], %s206
        // Predicated region
        $region33: #{tpu_custom_call.1} parent=31 // pred_check
          %p208 = pneg %p44
        $region34: #{tpu_custom_call.1} parent=31 // pred_check_branch
          %210 = sbr.rel (%p208) target = $region36
        $region35: #{tpu_custom_call.1} parent=31 // pred_region
          %212 = dma.done %s204, 1024
        $region36: #{tpu_custom_call.1} parent=31 // pred_fallthru
          _
        %s213 = sand.u32 %s23, 1
        %s214 = scalar_lea.sflag [#allocation6], %s213
        %s215 = sand.u32 %s57, 1
        %s216 = smul.addr %s215, 64
        %s217 = scalar_lea.vmem [#allocation5], %s216
        // Predicated region
        $region37: #{tpu_custom_call.1} parent=31 // pred_check
          %p218 = pneg %p70
        $region38: #{tpu_custom_call.1} parent=31 // pred_check_branch
          %220 = sbr.rel (%p218) target = $region40
        $region39: #{tpu_custom_call.1} parent=31 // pred_region
          %222 = dma.done %s214, 1024
        $region40: #{tpu_custom_call.1} parent=31 // pred_fallthru
          _
        // Predicated region
        $region41: #{tpu_custom_call.1} parent=31 // pred_check
          %p223 = pneg %p91
        $region42: #{tpu_custom_call.1} parent=31 // pred_check_branch
          %225 = sbr.rel (%p223) target = $region44
        $region43: #{tpu_custom_call.1} parent=31 // pred_region
          %227 = dma.done [#allocation6], 512
        $region44: #{tpu_custom_call.1} parent=31 // pred_fallthru
          _
        %s228 = sand.u32 %s31, 1
        %s229 = scalar_lea.sflag [#allocation3], %s228
        %s230 = sand.u32 %s31, 1
        %s231 = smul.addr %s230, 64
        %s232 = scalar_lea.vmem [#allocation2], %s231
        %p233 = pneg %p44
        %p234 = pneg %p41
        %s235 = sand.u32 %s23, 1
        %s236 = scalar_lea.sflag [#allocation6], %s235
        %s237 = sand.u32 %s57, 1
        %s238 = smul.addr %s237, 64
        %s239 = scalar_lea.vmem [#allocation5], %s238
        %p240 = pneg %p70
        %p241 = pneg %p67
        %p242 = pneg %p91
        %p243 = pneg %p88
        %p244 = pneg %p117
        %p245 = pneg %p114
        %s246 = sand.u32 %s104, 1
        %s247 = scalar_lea.sflag [#allocation4], %s246
        %s248 = sand.u32 %s104, 1
        %s249 = smul.addr %s248, 64
        %s250 = scalar_lea.vmem [#allocation8], %s249
        %s251 = smul.u32 4, %s23
        %s252 = smul.u32 4, %s23
        %s253 = smul.u32 4, %s23
        %v254 = vld [vmem:[%s207] sm:$0xff]
        %v255 = vld [vmem:[%s207 + $0x8] sm:$0xff]
        %v256 = vld [vmem:[%s207 + $0x10] sm:$0xff]
        %v257 = vld [vmem:[%s207 + $0x18] sm:$0xff]
        %v258 = vld [vmem:[%s207 + $0x20] sm:$0xff]
        %v259 = vld [vmem:[%s207 + $0x28] sm:$0xff]
        %v260 = vld [vmem:[%s207 + $0x30] sm:$0xff]
        %v261 = vld [vmem:[%s207 + $0x38] sm:$0xff]
        %v262 = vld [vmem:[#allocation7] sm:$0xff]
        %v263 = vld [vmem:[#allocation7 + $0x8] sm:$0xff]
        %v264 = vld [vmem:[#allocation7 + $0x10] sm:$0xff]
        %v265 = vld [vmem:[#allocation7 + $0x18] sm:$0xff]
        %vm266 = vcmask 261120
        %v268 = vsel %vm266, %v254, 0
        %v271 = vsel %vm266, %v255, 0
        %v274 = vsel %vm266, %v256, 0
        %v277 = vsel %vm266, %v257, 0
        %v280 = vsel %vm266, %v258, 0
        %v283 = vsel %vm266, %v259, 0
        %v286 = vsel %vm266, %v260, 0
        %v289 = vsel %vm266, %v261, 0
        %291 = vmatpush.msra.mxu0 0.0
        %292 = vmatpush.msra.mxu0 0.0
        %293 = vmatpush.msra.mxu0 0.0
        %294 = vmatpush.msra.mxu0 0.0
        %295 = vmatpush.msra.mxu0 0.0
        %296 = vmatpush.msra.mxu0 0.0
        %297 = vmatpush.msra.mxu0 0.0
        %298 = vmatpush.msra.mxu0 0.0
        %299 = vmatpush.msra.mxu0 0.0
        %300 = vmatpush.msra.mxu0 0.0
        %301 = vmatpush.msra.mxu0 0.0
        %302 = vmatpush.msra.mxu0 0.0
        %303 = vmatpush.msra.mxu0 %v265
        %304 = vmatpush.msra.mxu0 %v264
        %305 = vmatpush.msra.mxu0 %v263
        %306 = vmatpush.msra.mxu0 %v262
        %307 = vmatmul.f32.gmra.mxu0 %v268
        %v308 = vpop.f32.mrf.mxu0
        %v309 = vadd.f32 0.0, %v308
        %310 = vmatmul.f32.gmra.mxu0 %v271
        %v311 = vpop.f32.mrf.mxu0
        %v312 = vadd.f32 0.0, %v311
        %313 = vmatmul.f32.gmra.mxu0 %v274
        %v314 = vpop.f32.mrf.mxu0
        %v315 = vadd.f32 0.0, %v314
        %316 = vmatmul.f32.gmra.mxu0 %v277
        %v317 = vpop.f32.mrf.mxu0
        %v318 = vadd.f32 0.0, %v317
        %319 = vmatmul.f32.gmra.mxu0 %v280
        %v320 = vpop.f32.mrf.mxu0
        %v321 = vadd.f32 0.0, %v320
        %322 = vmatmul.f32.gmra.mxu0 %v283
        %v323 = vpop.f32.mrf.mxu0
        %v324 = vadd.f32 0.0, %v323
        %325 = vmatmul.f32.gmra.mxu0 %v286
        %v326 = vpop.f32.mrf.mxu0
        %v327 = vadd.f32 0.0, %v326
        %328 = vmatmul.f32.gmra.mxu0 %v289
        %v329 = vpop.f32.mrf.mxu0
        %v330 = vadd.f32 0.0, %v329
        %331 = vdwg.mxu0
        %v332 = vld [vmem:[%s217] sm:$0xff]
        %v333 = vld [vmem:[%s217 + $0x8] sm:$0xff]
        %v334 = vld [vmem:[%s217 + $0x10] sm:$0xff]
        %v335 = vld [vmem:[%s217 + $0x18] sm:$0xff]
        %v336 = vld [vmem:[%s217 + $0x20] sm:$0xff]
        %v337 = vld [vmem:[%s217 + $0x28] sm:$0xff]
        %v338 = vld [vmem:[%s217 + $0x30] sm:$0xff]
        %v339 = vld [vmem:[%s217 + $0x38] sm:$0xff]
        %vm340 = vcmask 130048
        %v342 = vsel %vm340, %v332, 0
        %v345 = vsel %vm340, %v333, 0
        %347 = vmatpush.msra.mxu0 0.0
        %348 = vmatpush.msra.mxu0 0.0
        %349 = vmatpush.msra.mxu0 0.0
        %350 = vmatpush.msra.mxu0 0.0
        %351 = vmatpush.msra.mxu0 0.0
        %352 = vmatpush.msra.mxu0 0.0
        %353 = vmatpush.msra.mxu0 0.0
        %354 = vmatpush.msra.mxu0 0.0
        %355 = vmatpush.msra.mxu0 0.0
        %356 = vmatpush.msra.mxu0 0.0
        %357 = vmatpush.msra.mxu0 0.0
        %358 = vmatpush.msra.mxu0 0.0
        %359 = vmatpush.msra.mxu0 0.0
        %360 = vmatpush.msra.mxu0 0.0
        %361 = vmatpush.msra.mxu0 %v312
        %362 = vmatpush.msra.mxu0 %v309
        %363 = vmatmul.f32.gmra.mxu0 %v342
        %v364 = vpop.f32.mrf.mxu0
        %v365 = vadd.f32 0.0, %v364
        %366 = vmatmul.f32.gmra.mxu0 %v345
        %v367 = vpop.f32.mrf.mxu0
        %v368 = vadd.f32 0.0, %v367
        %369 = vdwg.mxu0
        %v371 = vsel %vm340, %v334, 0
        %v374 = vsel %vm340, %v335, 0
        %376 = vmatpush.msra.mxu0 0.0
        %377 = vmatpush.msra.mxu0 0.0
        %378 = vmatpush.msra.mxu0 0.0
        %379 = vmatpush.msra.mxu0 0.0
        %380 = vmatpush.msra.mxu0 0.0
        %381 = vmatpush.msra.mxu0 0.0
        %382 = vmatpush.msra.mxu0 0.0
        %383 = vmatpush.msra.mxu0 0.0
        %384 = vmatpush.msra.mxu0 0.0
        %385 = vmatpush.msra.mxu0 0.0
        %386 = vmatpush.msra.mxu0 0.0
        %387 = vmatpush.msra.mxu0 0.0
        %388 = vmatpush.msra.mxu0 0.0
        %389 = vmatpush.msra.mxu0 0.0
        %390 = vmatpush.msra.mxu0 %v318
        %391 = vmatpush.msra.mxu0 %v315
        %392 = vmatmul.f32.gmra.mxu0 %v371
        %v393 = vpop.f32.mrf.mxu0
        %v394 = vadd.f32 0.0, %v393
        %395 = vmatmul.f32.gmra.mxu0 %v374
        %v396 = vpop.f32.mrf.mxu0
        %v397 = vadd.f32 0.0, %v396
        %398 = vdwg.mxu0
        %v400 = vsel %vm340, %v336, 0
        %v403 = vsel %vm340, %v337, 0
        %405 = vmatpush.msra.mxu0 0.0
        %406 = vmatpush.msra.mxu0 0.0
        %407 = vmatpush.msra.mxu0 0.0
        %408 = vmatpush.msra.mxu0 0.0
        %409 = vmatpush.msra.mxu0 0.0
        %410 = vmatpush.msra.mxu0 0.0
        %411 = vmatpush.msra.mxu0 0.0
        %412 = vmatpush.msra.mxu0 0.0
        %413 = vmatpush.msra.mxu0 0.0
        %414 = vmatpush.msra.mxu0 0.0
        %415 = vmatpush.msra.mxu0 0.0
        %416 = vmatpush.msra.mxu0 0.0
        %417 = vmatpush.msra.mxu0 0.0
        %418 = vmatpush.msra.mxu0 0.0
        %419 = vmatpush.msra.mxu0 %v324
        %420 = vmatpush.msra.mxu0 %v321
        %421 = vmatmul.f32.gmra.mxu0 %v400
        %v422 = vpop.f32.mrf.mxu0
        %v423 = vadd.f32 0.0, %v422
        %424 = vmatmul.f32.gmra.mxu0 %v403
        %v425 = vpop.f32.mrf.mxu0
        %v426 = vadd.f32 0.0, %v425
        %427 = vdwg.mxu0
        %v429 = vsel %vm340, %v338, 0
        %v432 = vsel %vm340, %v339, 0
        %434 = vmatpush.msra.mxu0 0.0
        %435 = vmatpush.msra.mxu0 0.0
        %436 = vmatpush.msra.mxu0 0.0
        %437 = vmatpush.msra.mxu0 0.0
        %438 = vmatpush.msra.mxu0 0.0
        %439 = vmatpush.msra.mxu0 0.0
        %440 = vmatpush.msra.mxu0 0.0
        %441 = vmatpush.msra.mxu0 0.0
        %442 = vmatpush.msra.mxu0 0.0
        %443 = vmatpush.msra.mxu0 0.0
        %444 = vmatpush.msra.mxu0 0.0
        %445 = vmatpush.msra.mxu0 0.0
        %446 = vmatpush.msra.mxu0 0.0
        %447 = vmatpush.msra.mxu0 0.0
        %448 = vmatpush.msra.mxu0 %v330
        %449 = vmatpush.msra.mxu0 %v327
        %450 = vmatmul.f32.gmra.mxu0 %v429
        %v451 = vpop.f32.mrf.mxu0
        %v452 = vadd.f32 0.0, %v451
        %453 = vmatmul.f32.gmra.mxu0 %v432
        %v454 = vpop.f32.mrf.mxu0
        %v455 = vadd.f32 0.0, %v454
        %456 = vdwg.mxu0
        %457 = vst [vmem:[%s250] sm:$0xff] %v365
        %458 = vst [vmem:[%s250 + $0x8] sm:$0xff] %v368
        %459 = vst [vmem:[%s250 + $0x10] sm:$0xff] %v394
        %460 = vst [vmem:[%s250 + $0x18] sm:$0xff] %v397
        %461 = vst [vmem:[%s250 + $0x20] sm:$0xff] %v423
        %462 = vst [vmem:[%s250 + $0x28] sm:$0xff] %v426
        %463 = vst [vmem:[%s250 + $0x30] sm:$0xff] %v452
        %464 = vst [vmem:[%s250 + $0x38] sm:$0xff] %v455
        %s465 = sand.u32 %s104, 1
        %s466 = scalar_lea.sflag [#allocation4], %s465
        %s467 = sand.u32 %s104, 1
        %s468 = smul.addr %s467, 64
        %s469 = scalar_lea.vmem [#allocation8], %s468
        // Predicated region
        $region45: #{tpu_custom_call.1} parent=31 // pred_check
          %p470 = pneg %p114
        $region46: #{tpu_custom_call.1} parent=31 // pred_check_branch
          %472 = sbr.rel (%p470) target = $region48
        $region47: #{tpu_custom_call.1} parent=31 // pred_region
          %s473 = smul.u32 4, %s23
          %475 = vsyncadd %s466, 0
          %s476 = smul.addr %s473, 2
          %s477 = smul.addr %s476, 8
          %s478 = scalar_lea.hbm %s3, %s477
          %s479 = sshll.u32 %s469, 4
          %s480 = int_to_ptr.vmem [resolvable:$true] %s479
          %s481 = sshll.u32 %s478, 4
          %s482 = int_to_ptr.hbm [resolvable:$true] %s481
          %487 = dma.vmem_to_hbm [thread:$0]  %s480, 1024, %s482, %s466, 128, 128, 8
        $region48: #{tpu_custom_call.1} parent=31 // pred_fallthru
          _
      $region32: #{tpu_custom_call.1} parent=5 // pred_fallthru
        _
      %p488 = scmp.le.s32.totalorder 2, %s18
      // Predicated region
      $region49: #{tpu_custom_call.1} parent=5 // pred_check
        %p489 = pneg %p488
      $region50: #{tpu_custom_call.1} parent=5 // pred_check_branch
        %491 = sbr.rel (%p489) target = $region52
      $region51: #{tpu_custom_call.1} parent=5 // pred_region
        %s492 = ssub.s32 %s18, 2
        // Predicated region
        $region53: #{tpu_custom_call.1} parent=51 // pred_check
          %p493 = pneg %p120
        $region54: #{tpu_custom_call.1} parent=51 // pred_check_branch
          %495 = sbr.rel (%p493) target = $region56
        $region55: #{tpu_custom_call.1} parent=51 // pred_region
          %s496 = sand.u32 %s105, 1
          %s497 = scalar_lea.sflag [#allocation4], %s496
          %s498 = sand.u32 %s105, 1
          %s499 = smul.addr %s498, 64
          %s500 = scalar_lea.vmem [#allocation8], %s499
          %502 = dma.done %s497, 1024
        $region56: #{tpu_custom_call.1} parent=51 // pred_fallthru
          _
      $region52: #{tpu_custom_call.1} parent=5 // pred_fallthru
        _
    $region6: #{tpu_custom_call.1} parent=1 // loop_footer
      %s22 = sadd.s32 1, %s18
    $region7: #{tpu_custom_call.1} parent=1 // loop_footer_branch
      %17 = sbr.rel target = $region3
    $region8: #{tpu_custom_call.1} parent=1 // loop_exit
      _
    %503 = vsyncpa [#allocation3], 1
    %s504 = scalar_lea.sflag [#allocation3], 1
    %505 = vsyncpa %s504, 1
    %506 = vsyncpa [#allocation6], 1
    %s507 = scalar_lea.sflag [#allocation6], 1
    %508 = vsyncpa %s507, 1
    %509 = vsyncpa [#allocation4], 1
    %s510 = scalar_lea.sflag [#allocation4], 1
    %511 = vsyncpa %s510, 1

</llo_original>
